<compile_context>
chip_gen: v6e
topology: v6e:2x2x1
jax: 0.10.0
libtpu: 0.0.40
codegen_flags: <defaults>
</compile_context>

<pallas_src>
import functools

import jax
import jax.numpy as jnp
from jax import lax
from jax.experimental import pallas as pl
from jax.experimental.pallas import tpu as pltpu


def _rope_kernel(x_ref, halo_ref, cos_ref, sin_ref, o_ref, *, half_table):
    # x_ref:    (TN, D)          current (batch, seq-tile) slice (batch dim squeezed)
    # halo_ref: (1, D)           sequence row preceding this tile (wraps to x[N-1] for tile 0)
    # cos_ref:  (TN, D or D//2)  precomputed cos table tile
    # sin_ref:  (TN, D or D//2)  precomputed sin table tile
    x = x_ref[...]
    prev = halo_ref[...]
    cos_t = cos_ref[...]
    sin_t = sin_ref[...]

    # torch.roll(x, 1, dims=1): out[n] = x[n-1].  XLU sublane rotate, then patch row 0
    # with the halo row (previous tile's last row / global wraparound) using a narrow
    # (TN, 1) mask instead of a full-tile iota.
    rolled = pltpu.roll(x, shift=1, axis=0)
    row0 = lax.broadcasted_iota(jnp.int32, (x.shape[0], 1), 0) == 0
    rolled = jnp.where(row0, prev, rolled)

    if half_table:
        # Tables hold only the first D//2 columns; the concatenated table repeats them.
        h = cos_t.shape[-1]  # D // 2, a multiple of 128 on this path -> aligned slices.
        o_ref[:, :h] = (x[:, :h] * cos_t + rolled[:, :h] * sin_t).astype(o_ref.dtype)
        o_ref[:, h:] = (x[:, h:] * cos_t + rolled[:, h:] * sin_t).astype(o_ref.dtype)
    else:
        o_ref[...] = (x * cos_t + rolled * sin_t).astype(o_ref.dtype)


def _choose_seq_tile(N, D, x_itemsize, tab_itemsize, half_table):
    """Pick TN (multiple of 8, or N itself) from a double-buffered VMEM byte budget."""
    tab_width = D // 2 if half_table else D
    # Double-buffered live bytes per sequence row: x + out tiles plus cos + sin tiles.
    bytes_per_row = 2 * (2 * D * x_itemsize + 2 * tab_width * tab_itemsize)
    budget = 12 * 1024 * 1024  # fits v5e's 16 MiB default scoped VMEM and v7x's 64 MiB
    tn = max(8, (budget // bytes_per_row) // 8 * 8)
    tn = min(tn, 2048)  # HBM roofline plateaus around 512+ rows; no point going huge
    if tn >= N:
        return N  # full-extent block is always legal, even if N is not a multiple of 8
    return int(tn)


@functools.partial(jax.jit, static_argnames=("tn", "half_table"))
def _rope_forward(x, cos_tab, sin_tab, *, tn, half_table):
    B, N, D = x.shape
    n_nt = pl.cdiv(N, tn)
    W = cos_tab.shape[-1]

    # Halo: for each sequence tile, the row preceding its first row (wraps at 0).
    prev_idx = (jnp.arange(n_nt, dtype=jnp.int32) * tn - 1) % N
    halo = x[:, prev_idx, :][:, :, None, :]  # (B, n_nt, 1, D)

    if n_nt >= 2:
        # Leading parallel axis with extent >= 2 for v7x megacore; batch innermost so the
        # cos/sin block index is unchanged across consecutive steps (no re-fetch).
        grid = (n_nt, B)
        x_map = lambda nt, b: (b, nt, 0)
        halo_map = lambda nt, b: (b, nt, 0, 0)
        tab_map = lambda nt, b: (nt, 0)
    else:
        grid = (B, n_nt)
        x_map = lambda b, nt: (b, nt, 0)
        halo_map = lambda b, nt: (b, nt, 0, 0)
        tab_map = lambda b, nt: (nt, 0)

    kernel = functools.partial(_rope_kernel, half_table=half_table)
    return pl.pallas_call(
        kernel,
        out_shape=jax.ShapeDtypeStruct((B, N, D), x.dtype),
        grid_spec=pltpu.PrefetchScalarGridSpec(
            num_scalar_prefetch=0,
            grid=grid,
            in_specs=[
                pl.BlockSpec((None, tn, D), x_map),        # x
                pl.BlockSpec((None, None, 1, D), halo_map),  # halo row
                pl.BlockSpec((tn, W), tab_map),            # cos table
                pl.BlockSpec((tn, W), tab_map),            # sin table
            ],
            out_specs=pl.BlockSpec((None, tn, D), x_map),
        ),
        compiler_params=pltpu.CompilerParams(
            dimension_semantics=("parallel", "parallel"),
            vmem_limit_bytes=32 * 1024 * 1024,
        ),
    )(x, halo, cos_tab, sin_tab)


class RoPE:
    def __init__(self, dim, max_len=50000):
        assert dim % 2 == 0
        self.dim = dim
        self.max_len = max_len
        # Deterministic "parameter" (buffer) setup, identical to the PyTorch __init__.
        inv_freq = 1.0 / 10000.0 ** (jnp.arange(0, dim, 2, dtype=jnp.float32) / dim)
        position = jnp.arange(0, max_len, dtype=jnp.float32)[:, None]  # (max_len, 1)
        self.sinusoid = position @ inv_freq[None, :]                   # (max_len, dim//2)
        self._table_cache = {}
        # Half-width table streaming only when D//2 is lane-aligned (128-multiple).
        self._half_table = (dim % 256 == 0)

    def _tables(self, N, x_dtype):
        # Tables are computed EAGERLY (outside any jit) and cached as concrete arrays.
        tab_dtype = jnp.bfloat16 if jnp.dtype(x_dtype) == jnp.dtype(jnp.bfloat16) else jnp.float32
        key = (N, jnp.dtype(tab_dtype).name)
        if key not in self._table_cache:
            s = self.sinusoid[:N, :]                      # (N, D//2) f32
            cos_t, sin_t = jnp.cos(s), jnp.sin(s)
            if not self._half_table:
                cos_t = jnp.concatenate([cos_t, cos_t], axis=-1)  # (N, D)
                sin_t = jnp.concatenate([sin_t, sin_t], axis=-1)
            if len(self._table_cache) >= 16:              # keep the cache bounded
                self._table_cache.pop(next(iter(self._table_cache)))
            self._table_cache[key] = (cos_t.astype(tab_dtype), sin_t.astype(tab_dtype))
        return self._table_cache[key]

    def __call__(self, x, *, seq_tile=None):
        B, N, D = x.shape
        assert D == self.dim and N <= self.max_len
        cos_t, sin_t = self._tables(N, x.dtype)
        if seq_tile is None:
            tn = _choose_seq_tile(N, D, x.dtype.itemsize, cos_t.dtype.itemsize,
                                  self._half_table)
        else:
            tn = min(int(seq_tile), N)
            assert tn == N or tn % 8 == 0, "seq_tile must be a multiple of 8 (or >= N)"
        return _rope_forward(x, cos_t, sin_t, tn=tn, half_table=self._half_table)


def _rope_reference(x, sinusoid):
    B, N, D = x.shape
    s = sinusoid[:N, :]
    s2 = jnp.concatenate([s, s], axis=-1)
    xf = x.astype(jnp.float32)
    rolled = jnp.roll(xf, 1, axis=1)
    return xf * jnp.cos(s2)[None] + rolled * jnp.sin(s2)[None]


if __name__ == "__main__":
    key = jax.random.PRNGKey(0)

    # 1) Small f32 check, full-width table path (D not a multiple of 256), single seq tile.
    rope32 = RoPE(dim=32, max_len=50000)
    x1 = jax.random.normal(key, (2, 8, 32), dtype=jnp.float32)
    out1 = jax.block_until_ready(rope32(x1))
    ref1 = _rope_reference(x1, rope32.sinusoid)
    assert out1.shape == x1.shape
    assert jnp.allclose(out1, ref1, atol=1e-5, rtol=1e-5)

    # 2) Half-width table path (D=256), multiple sequence tiles incl. a PARTIAL last tile
    #    (N=40 with seq_tile=16 -> tiles 16/16/8): exercises halo wraparound + padding.
    rope256 = RoPE(dim=256, max_len=2048)
    x2 = jax.random.normal(jax.random.PRNGKey(0), (2, 40, 256), dtype=jnp.float32)
    out2 = jax.block_until_ready(rope256(x2, seq_tile=16))
    ref2 = _rope_reference(x2, rope256.sinusoid)
    assert jnp.allclose(out2, ref2, atol=1e-5, rtol=1e-5)

    # 3) bf16 input: bf16 tables + bf16 VPU math, batch-leading grid (single seq tile).
    x3 = jax.random.normal(jax.random.PRNGKey(0), (2, 16, 256), dtype=jnp.float32)
    x3 = x3.astype(jnp.bfloat16)
    out3 = jax.block_until_ready(rope256(x3))
    ref3 = _rope_reference(x3, rope256.sinusoid)
    assert jnp.allclose(out3.astype(jnp.float32), ref3, atol=1e-1, rtol=1e-1)

    print("KERNEL_OK")
</pallas_src>

<mosaic_0001>
module attributes {stable_mosaic.version = 11 : i64} {
  func.func @_rope_kernel(%arg0: i32, %arg1: i32, %arg2: memref<1x8x32xf32, #tpu.memory_space<vmem>>, %arg3: memref<1x1x1x32xf32, #tpu.memory_space<vmem>>, %arg4: memref<8x32xf32, #tpu.memory_space<vmem>>, %arg5: memref<8x32xf32, #tpu.memory_space<vmem>>, %arg6: memref<1x8x32xf32, #tpu.memory_space<vmem>>) attributes {dimension_semantics = [#tpu.dimension_semantics<parallel>, #tpu.dimension_semantics<parallel>], iteration_bounds = array<i64: 2, 1>, scalar_prefetch = 0 : i64, scratch_operands = 0 : i64, tpu.core_type = #tpu.core_type<tc>, window_params = [{transform_indices = @transform_0, window_bounds = array<i64: 1, 8, 32>}, {transform_indices = @transform_1, window_bounds = array<i64: 1, 1, 1, 32>}, {transform_indices = @transform_2, window_bounds = array<i64: 8, 32>}, {transform_indices = @transform_3, window_bounds = array<i64: 8, 32>}, {transform_indices = @transform_4, window_bounds = array<i64: 1, 8, 32>}]} {
    %c0 = arith.constant 0 : index
    %c0_0 = arith.constant 0 : index
    %c0_1 = arith.constant 0 : index
    %0 = vector.load %arg2[%c0, %c0_0, %c0_1] : memref<1x8x32xf32, #tpu.memory_space<vmem>>, vector<1x8x32xf32>
    %1 = vector.shape_cast %0 : vector<1x8x32xf32> to vector<8x32xf32>
    %c0_2 = arith.constant 0 : index
    %c0_3 = arith.constant 0 : index
    %c0_4 = arith.constant 0 : index
    %c0_5 = arith.constant 0 : index
    %2 = vector.load %arg3[%c0_2, %c0_3, %c0_4, %c0_5] : memref<1x1x1x32xf32, #tpu.memory_space<vmem>>, vector<1x1x1x32xf32>
    %3 = vector.shape_cast %2 : vector<1x1x1x32xf32> to vector<1x32xf32>
    %c0_6 = arith.constant 0 : index
    %c0_7 = arith.constant 0 : index
    %4 = vector.load %arg4[%c0_6, %c0_7] : memref<8x32xf32, #tpu.memory_space<vmem>>, vector<8x32xf32>
    %c0_8 = arith.constant 0 : index
    %c0_9 = arith.constant 0 : index
    %5 = vector.load %arg5[%c0_8, %c0_9] : memref<8x32xf32, #tpu.memory_space<vmem>>, vector<8x32xf32>
    %c1_i32 = arith.constant 1 : i32
    %6 = tpu.dynamic_rotate %1 by %c1_i32 dim 0 : vector<8x32xf32>, i32 -> vector<8x32xf32>
    %7 = tpu.iota {dimensions = array<i32: 0>} : vector<8x1xi32>
    %c0_i32 = arith.constant 0 : i32
    %8 = vector.broadcast %c0_i32 : i32 to vector<8x1xi32>
    %9 = arith.cmpi eq, %7, %8 : vector<8x1xi32>
    %10 = vector.shape_cast %9 : vector<8x1xi1> to vector<8x1xi1>
    %11 = vector.broadcast %10 : vector<8x1xi1> to vector<8x32xi1>
    %12 = vector.shape_cast %3 : vector<1x32xf32> to vector<1x32xf32>
    %13 = vector.broadcast %12 : vector<1x32xf32> to vector<8x32xf32>
    %14 = arith.select %11, %13, %6 : vector<8x32xi1>, vector<8x32xf32>
    %15 = arith.mulf %1, %4 : vector<8x32xf32>
    %16 = arith.mulf %14, %5 : vector<8x32xf32>
    %17 = arith.addf %15, %16 : vector<8x32xf32>
    %c0_10 = arith.constant 0 : index
    %c0_11 = arith.constant 0 : index
    %c0_12 = arith.constant 0 : index
    %18 = vector.load %arg6[%c0_10, %c0_11, %c0_12] : memref<1x8x32xf32, #tpu.memory_space<vmem>>, vector<1x8x32xf32>
    %19 = vector.shape_cast %18 : vector<1x8x32xf32> to vector<8x32xf32>
    %20 = vector.shape_cast %17 : vector<8x32xf32> to vector<1x8x32xf32>
    tpu.vector_store %arg6[%c0_10, %c0_11, %c0_12], %20 {strides = array<i32>} : memref<1x8x32xf32, #tpu.memory_space<vmem>>, vector<1x8x32xf32>,
    return
  }
  func.func @transform_0(%arg0: i32, %arg1: i32) -> (i32, i32, i32) {
    %c0_i32 = arith.constant 0 : i32
    %c0_i32_0 = arith.constant 0 : i32
    return %arg0, %arg1, %c0_i32 : i32, i32, i32
  }
  func.func @transform_1(%arg0: i32, %arg1: i32) -> (i32, i32, i32, i32) {
    %c0_i32 = arith.constant 0 : i32
    %c0_i32_0 = arith.constant 0 : i32
    %c0_i32_1 = arith.constant 0 : i32
    return %arg0, %arg1, %c0_i32, %c0_i32_0 : i32, i32, i32, i32
  }
  func.func @transform_2(%arg0: i32, %arg1: i32) -> (i32, i32) {
    %c0_i32 = arith.constant 0 : i32
    %c0_i32_0 = arith.constant 0 : i32
    return %arg1, %c0_i32 : i32, i32
  }
  func.func @transform_3(%arg0: i32, %arg1: i32) -> (i32, i32) {
    %c0_i32 = arith.constant 0 : i32
    %c0_i32_0 = arith.constant 0 : i32
    return %arg1, %c0_i32 : i32, i32
  }
  func.func @transform_4(%arg0: i32, %arg1: i32) -> (i32, i32, i32) {
    %c0_i32 = arith.constant 0 : i32
    %c0_i32_0 = arith.constant 0 : i32
    return %arg0, %arg1, %c0_i32 : i32, i32, i32
  }
}

</mosaic_0001>

<llo_original>
// kernel: _rope_forward.1
$region0: #{_rope_forward.1}
  #allocation0 [shape = 'u32[]', space=smem, size = 0x4, offset = 0x4, fixed_abs, tag = 'smem constant byte address 0x4 - core index']
  #allocation1 [shape = 'u32[144,128]{1,0:T(1,128)}', space=vmem, size = 0x12000, scoped, tag = 'internal scratch']
  %s0 = inlined_call_operand.hbm [shape: f32[2,8,32], index: 0, kind: input, shape index: {}]
  %s1 = inlined_call_operand.vmem [shape: f32[2,1,1,32], index: 1, kind: input, shape index: {}]
  %s2 = inlined_call_operand.hbm [shape: f32[8,32], index: 2, kind: input, shape index: {}]
  %s3 = inlined_call_operand.hbm [shape: f32[8,32], index: 3, kind: input, shape index: {}]
  %s4 = inlined_call_operand.hbm [shape: f32[2,8,32], index: 4, kind: output, shape index: {}]
  %s5 = sld [smem:[#allocation0]]
  $region61: #{_rope_forward.1} parent=0
    _
  %s7 = ssub.s32 1, %s5
  %s8 = scalar_select 0, %s7, %s5
  $region1: #{_rope_forward.1} parent=0
    #allocation2 [shape = 'u8[8192]{0}', space=vmem, size = 0x2000, scoped, tag = 'input window, operand 0']
    #allocation3 [shape = 's32[2]{0}', space=sflag, size = 0x8, scoped, tag = 'scoped memory for _rope_forward.1']
    #allocation4 [shape = 's32[2]{0}', space=sflag, size = 0x8, scoped, tag = 'scoped memory for _rope_forward.1']
    #allocation5 [shape = 'u8[4096]{0}', space=vmem, size = 0x1000, scoped, tag = 'input window, operand 2, single buffered']
    #allocation6 [shape = 's32[1]{0}', space=sflag, size = 0x4, scoped, tag = 'scoped memory for _rope_forward.1']
    #allocation7 [shape = 'u8[4096]{0}', space=vmem, size = 0x1000, scoped, tag = 'input window, operand 3, single buffered']
    #allocation8 [shape = 'u8[8192]{0}', space=vmem, size = 0x2000, scoped, tag = 'output window, operand 0']
    %9 = vsyncpa [#allocation3], 0
    %s10 = scalar_lea.sflag [#allocation3], 1
    %11 = vsyncpa %s10, 0
    %12 = vsyncpa [#allocation6], 0
    %13 = vsyncpa [#allocation4], 0
    %s14 = scalar_lea.sflag [#allocation4], 1
    %15 = vsyncpa %s14, 0
    loop: start=0, step=1, limit=4
    $region2: #{_rope_forward.1} parent=1 // loop_pre_header
      _
    $region3: #{_rope_forward.1} parent=1 // loop_header
      %s17 = sphi 0, %s21
      %p18 = scmp.ge.s32.totalorder %s17, 4
      %s24 = sphi 0, %s36
      %s25 = sphi 0, %s32
      %s26 = sphi 0, %s24
      %s27 = sphi 0, %s25
      %s28 = sphi 0, %s26
      %s29 = sphi 0, %s27
      %s41 = sphi 0, %s43
      %s44 = sphi 0, %s41
      %s45 = sphi 0, %s44
      %s61 = sphi 0, %s45
      %s69 = sphi 0, %s71
      %s72 = sphi 0, %s69
      %s73 = sphi 0, %s72
      %s89 = sphi 0, %s73
      %s95 = sphi 0, %s97
      %s98 = sphi 0, %s95
      %s99 = sphi 0, %s98
      %s115 = sphi 0, %s99
      %s121 = sphi 0, %s123
      %s124 = sphi 0, %s121
      %s125 = sphi 0, %s124
      %s141 = sphi 0, %s125
      %s149 = sphi 0, %s151
      %s152 = sphi 0, %s149
      %s153 = sphi 0, %s152
      %s169 = sphi 0, %s153
    $region4: #{_rope_forward.1} parent=1 // loop_header_branch
      %20 = sbr.rel (%p18) target = $region8
    $region5: #{_rope_forward.1} parent=1 // loop_body
      %s22 = ssub.s32 %s17, 1
      %s23 = ssub.s32 %s17, 2
      %s30 = sadd.s32 1, %s25
      %p31 = scmp.ge.s32.totalorder %s30, 1
      %s32 = scalar_select %p31, 0, %s30
      %s33 = sadd.s32 1, %s24
      %s34 = scalar_select %p31, %s33, %s24
      %p35 = scmp.ge.s32.totalorder %s34, 2
      %s36 = scalar_select %p35, 0, %s34
      %s37 = ssub.s32 %s24, %s36
      %s38 = ssub.s32 %s25, %s32
      %s39 = sor.u32 %s37, %s38
      %p40 = scmp.eq.s32.totalorder %s39, 0
      %s42 = sadd.s32 %s41, 1
      %s43 = scalar_select %p40, %s41, %s42
      %p46 = pneg %p40
      %p47 = scmp.eq.s32.totalorder %s17, 1
      %p48 = por %p46, %p47
      %p49 = scmp.ne.s32.totalorder %s41, %s44
      %p50 = scmp.eq.s32.totalorder %s17, 0
      %p51 = por %p49, %p50
      %p52 = scmp.ne.s32.totalorder %s41, %s44
      %p53 = scmp.eq.s32.totalorder %s22, 1
      %p54 = por %p52, %p53
      %p55 = scmp.ne.s32.totalorder %s44, %s45
      %p56 = scmp.eq.s32.totalorder %s22, 0
      %p57 = por %p55, %p56
      %p58 = scmp.ne.s32.totalorder %s44, %s45
      %p59 = scmp.eq.s32.totalorder %s23, 1
      %p60 = por %p58, %p59
      %p62 = scmp.ne.s32.totalorder %s45, %s61
      %p63 = scmp.eq.s32.totalorder %s23, 0
      %p64 = por %p62, %p63
      %s65 = ssub.s32 %s24, %s36
      %s66 = ssub.s32 %s25, %s32
      %s67 = sor.u32 %s65, %s66
      %p68 = scmp.eq.s32.totalorder %s67, 0
      %s70 = sadd.s32 %s69, 1
      %s71 = scalar_select %p68, %s69, %s70
      %p74 = pneg %p68
      %p75 = scmp.eq.s32.totalorder %s17, 1
      %p76 = por %p74, %p75
      %p77 = scmp.ne.s32.totalorder %s69, %s72
      %p78 = scmp.eq.s32.totalorder %s17, 0
      %p79 = por %p77, %p78
      %p80 = scmp.ne.s32.totalorder %s69, %s72
      %p81 = scmp.eq.s32.totalorder %s22, 1
      %p82 = por %p80, %p81
      %p83 = scmp.ne.s32.totalorder %s72, %s73
      %p84 = scmp.eq.s32.totalorder %s22, 0
      %p85 = por %p83, %p84
      %p86 = scmp.ne.s32.totalorder %s72, %s73
      %p87 = scmp.eq.s32.totalorder %s23, 1
      %p88 = por %p86, %p87
      %p90 = scmp.ne.s32.totalorder %s73, %s89
      %p91 = scmp.eq.s32.totalorder %s23, 0
      %p92 = por %p90, %p91
      %s93 = ssub.s32 %s25, %s32
      %p94 = scmp.eq.s32.totalorder %s93, 0
      %s96 = sadd.s32 %s95, 1
      %s97 = scalar_select %p94, %s95, %s96
      %p100 = pneg %p94
      %p101 = scmp.eq.s32.totalorder %s17, 1
      %p102 = por %p100, %p101
      %p103 = scmp.ne.s32.totalorder %s95, %s98
      %p104 = scmp.eq.s32.totalorder %s17, 0
      %p105 = por %p103, %p104
      %p106 = scmp.ne.s32.totalorder %s95, %s98
      %p107 = scmp.eq.s32.totalorder %s22, 1
      %p108 = por %p106, %p107
      %p109 = scmp.ne.s32.totalorder %s98, %s99
      %p110 = scmp.eq.s32.totalorder %s22, 0
      %p111 = por %p109, %p110
      %p112 = scmp.ne.s32.totalorder %s98, %s99
      %p113 = scmp.eq.s32.totalorder %s23, 1
      %p114 = por %p112, %p113
      %p116 = scmp.ne.s32.totalorder %s99, %s115
      %p117 = scmp.eq.s32.totalorder %s23, 0
      %p118 = por %p116, %p117
      %s119 = ssub.s32 %s25, %s32
      %p120 = scmp.eq.s32.totalorder %s119, 0
      %s122 = sadd.s32 %s121, 1
      %s123 = scalar_select %p120, %s121, %s122
      %p126 = pneg %p120
      %p127 = scmp.eq.s32.totalorder %s17, 1
      %p128 = por %p126, %p127
      %p129 = scmp.ne.s32.totalorder %s121, %s124
      %p130 = scmp.eq.s32.totalorder %s17, 0
      %p131 = por %p129, %p130
      %p132 = scmp.ne.s32.totalorder %s121, %s124
      %p133 = scmp.eq.s32.totalorder %s22, 1
      %p134 = por %p132, %p133
      %p135 = scmp.ne.s32.totalorder %s124, %s125
      %p136 = scmp.eq.s32.totalorder %s22, 0
      %p137 = por %p135, %p136
      %p138 = scmp.ne.s32.totalorder %s124, %s125
      %p139 = scmp.eq.s32.totalorder %s23, 1
      %p140 = por %p138, %p139
      %p142 = scmp.ne.s32.totalorder %s125, %s141
      %p143 = scmp.eq.s32.totalorder %s23, 0
      %p144 = por %p142, %p143
      %s145 = ssub.s32 %s24, %s36
      %s146 = ssub.s32 %s25, %s32
      %s147 = sor.u32 %s145, %s146
      %p148 = scmp.eq.s32.totalorder %s147, 0
      %s150 = sadd.s32 %s149, 1
      %s151 = scalar_select %p148, %s149, %s150
      %p154 = pneg %p148
      %p155 = scmp.eq.s32.totalorder %s17, 1
      %p156 = por %p154, %p155
      %p157 = scmp.ne.s32.totalorder %s149, %s152
      %p158 = scmp.eq.s32.totalorder %s17, 0
      %p159 = por %p157, %p158
      %p160 = scmp.ne.s32.totalorder %s149, %s152
      %p161 = scmp.eq.s32.totalorder %s22, 1
      %p162 = por %p160, %p161
      %p163 = scmp.ne.s32.totalorder %s152, %s153
      %p164 = scmp.eq.s32.totalorder %s22, 0
      %p165 = por %p163, %p164
      %p166 = scmp.ne.s32.totalorder %s152, %s153
      %p167 = scmp.eq.s32.totalorder %s23, 1
      %p168 = por %p166, %p167
      %p170 = scmp.ne.s32.totalorder %s153, %s169
      %p171 = scmp.eq.s32.totalorder %s23, 0
      %p172 = por %p170, %p171
      %p173 = scmp.le.s32.totalorder 1, %s17
      %p174 = scmp.lt.s32.totalorder %s17, 3
      %p175 = pnand %p173, %p174
      %p176 = pneg %p175
      // Predicated region
      $region9: #{_rope_forward.1} parent=5 // pred_check
        _
      $region10: #{_rope_forward.1} parent=5 // pred_check_branch
        %178 = sbr.rel (%p175) target = $region12
      $region11: #{_rope_forward.1} parent=5 // pred_region
        %s179 = ssub.s32 %s17, 1
        // Predicated region
        $region13: #{_rope_forward.1} parent=11 // pred_check
          %p180 = pneg %p111
        $region14: #{_rope_forward.1} parent=11 // pred_check_branch
          %182 = sbr.rel (%p180) target = $region16
        $region15: #{_rope_forward.1} parent=11 // pred_region
          %s184 = ssub.s32 128, 128
          %185 = vsyncadd [#allocation6], %s184
          %s186 = smul.addr %s27, 128
          %s187 = scalar_lea.hbm %s2, %s186
          %s189 = sshll.u32 [#allocation5], 4
          %s190 = int_to_ptr.vmem [resolvable:$true] %s189
          %192 = dma.hbm_to_vmem [thread:$0]  %s187, 128, %s190, [#allocation6]
        $region16: #{_rope_forward.1} parent=11 // pred_fallthru
          _
        // Predicated region
        $region17: #{_rope_forward.1} parent=11 // pred_check
          %p193 = pneg %p137
        $region18: #{_rope_forward.1} parent=11 // pred_check_branch
          %195 = sbr.rel (%p193) target = $region20
        $region19: #{_rope_forward.1} parent=11 // pred_region
          %s197 = ssub.s32 128, 128
          %198 = vsyncadd [#allocation6], %s197
          %s199 = smul.addr %s27, 128
          %s200 = scalar_lea.hbm %s3, %s199
          %s202 = sshll.u32 [#allocation7], 4
          %s203 = int_to_ptr.vmem [resolvable:$true] %s202
          %205 = dma.hbm_to_vmem [thread:$0]  %s200, 128, %s203, [#allocation6]
        $region20: #{_rope_forward.1} parent=11 // pred_fallthru
          _
      $region12: #{_rope_forward.1} parent=5 // pred_fallthru
        _
      %p206 = scmp.lt.s32.totalorder %s17, 2
      // Predicated region
      $region21: #{_rope_forward.1} parent=5 // pred_check
        %p207 = pneg %p206
      $region22: #{_rope_forward.1} parent=5 // pred_check_branch
        %209 = sbr.rel (%p207) target = $region24
      $region23: #{_rope_forward.1} parent=5 // pred_region
        // Predicated region
        $region25: #{_rope_forward.1} parent=23 // pred_check
          %p210 = pneg %p51
        $region26: #{_rope_forward.1} parent=23 // pred_check_branch
          %212 = sbr.rel (%p210) target = $region28
        $region27: #{_rope_forward.1} parent=23 // pred_region
          %s213 = sand.u32 %s41, 1
          %s214 = scalar_lea.sflag [#allocation3], %s213
          %s215 = sand.u32 %s41, 1
          %s216 = smul.addr %s215, 8
          %s217 = scalar_lea.vmem [#allocation2], %s216
          %s219 = ssub.s32 128, 128
          %220 = vsyncadd %s214, %s219
          %s221 = sadd.s32 %s25, %s24
          %s222 = smul.addr %s221, 128
          %s223 = scalar_lea.hbm %s0, %s222
          %s225 = sshll.u32 %s217, 4
          %s226 = int_to_ptr.vmem [resolvable:$true] %s225
          %228 = dma.hbm_to_vmem [thread:$0]  %s223, 128, %s226, %s214
        $region28: #{_rope_forward.1} parent=23 // pred_fallthru
          _
        // Predicated region
        $region29: #{_rope_forward.1} parent=23 // pred_check
          %p229 = pneg %p79
        $region30: #{_rope_forward.1} parent=23 // pred_check_branch
          %231 = sbr.rel (%p229) target = $region32
        $region31: #{_rope_forward.1} parent=23 // pred_region
          %p232 = scmp.lt.s32.totalorder %s24, 1
          %s233 = scalar_select %p232, %s24, 1
          %p234 = scmp.lt.s32.totalorder %s25, 0
          %s235 = scalar_select %p234, %s25, 0
          %s236 = sadd.s32 %s235, %s233
          %s237 = scalar_lea.vmem %s1, %s236
        $region32: #{_rope_forward.1} parent=23 // pred_fallthru
          _
      $region24: #{_rope_forward.1} parent=5 // pred_fallthru
        _
      %p238 = scmp.le.s32.totalorder 1, %s17
      %p239 = scmp.lt.s32.totalorder %s17, 3
      %p240 = pnand %p238, %p239
      %p241 = pneg %p240
      // Predicated region
      $region33: #{_rope_forward.1} parent=5 // pred_check
        _
      $region34: #{_rope_forward.1} parent=5 // pred_check_branch
        %243 = sbr.rel (%p240) target = $region36
      $region35: #{_rope_forward.1} parent=5 // pred_region
        %s244 = ssub.s32 %s17, 1
        %s245 = sand.u32 %s44, 1
        %s246 = scalar_lea.sflag [#allocation3], %s245
        %s247 = sand.u32 %s44, 1
        %s248 = smul.addr %s247, 8
        %s249 = scalar_lea.vmem [#allocation2], %s248
        // Predicated region
        $region37: #{_rope_forward.1} parent=35 // pred_check
          %p250 = pneg %p57
        $region38: #{_rope_forward.1} parent=35 // pred_check_branch
          %252 = sbr.rel (%p250) target = $region40
        $region39: #{_rope_forward.1} parent=35 // pred_region
          %253 = dma.done %s246, 128
        $region40: #{_rope_forward.1} parent=35 // pred_fallthru
          _
        // Predicated region
        $region41: #{_rope_forward.1} parent=35 // pred_check
          %p254 = pneg %p111
        $region42: #{_rope_forward.1} parent=35 // pred_check_branch
          %256 = sbr.rel (%p254) target = $region44
        $region43: #{_rope_forward.1} parent=35 // pred_region
          %257 = dma.done [#allocation6], 128
        $region44: #{_rope_forward.1} parent=35 // pred_fallthru
          _
        // Predicated region
        $region45: #{_rope_forward.1} parent=35 // pred_check
          %p258 = pneg %p137
        $region46: #{_rope_forward.1} parent=35 // pred_check_branch
          %260 = sbr.rel (%p258) target = $region48
        $region47: #{_rope_forward.1} parent=35 // pred_region
          %261 = dma.done [#allocation6], 128
        $region48: #{_rope_forward.1} parent=35 // pred_fallthru
          _
        %s262 = sand.u32 %s44, 1
        %s263 = scalar_lea.sflag [#allocation3], %s262
        %s264 = sand.u32 %s44, 1
        %s265 = smul.addr %s264, 8
        %s266 = scalar_lea.vmem [#allocation2], %s265
        %p267 = pneg %p57
        %p268 = pneg %p54
        %p269 = scmp.lt.s32.totalorder %s26, 1
        %s270 = scalar_select %p269, %s26, 1
        %p271 = scmp.lt.s32.totalorder %s27, 0
        %s272 = scalar_select %p271, %s27, 0
        %s273 = sadd.s32 %s272, %s270
        %s274 = scalar_lea.vmem %s1, %s273
        %p275 = pneg %p85
        %p276 = pneg %p82
        %p277 = pneg %p111
        %p278 = pneg %p108
        %p279 = pneg %p137
        %p280 = pneg %p134
        %p281 = pneg %p165
        %p282 = pneg %p162
        %s283 = sand.u32 %s152, 1
        %s284 = scalar_lea.sflag [#allocation4], %s283
        %s285 = sand.u32 %s152, 1
        %s286 = smul.addr %s285, 8
        %s287 = scalar_lea.vmem [#allocation8], %s286
        %p288 = scmp.lt.s32.totalorder %s26, 1
        %s289 = scalar_select %p288, %s26, 1
        %p290 = scmp.lt.s32.totalorder %s27, 0
        %s291 = scalar_select %p290, %s27, 0
        %s292 = sadd.s32 %s291, %s289
        %s293 = scalar_lea.vmem %s1, %s292
        %v294 = vld [vmem:[%s249] sm:$0xff]
        %v295 = vld [vmem:[%s293] sm:$0x1]
        %v296 = vld [vmem:[#allocation5] sm:$0xff]
        %v297 = vld [vmem:[#allocation7] sm:$0xff]
        %v298 = vrot.slane %v294, 7
        %v299 = vlaneseq
        %v300 = vshrl.u32 %v299, 7
        %vm301 = vcmp.eq.s32.totalorder %v300, 0
        %v302 = vsel %vm301, 1, 0
        %vm303 = vcmp.eq.s32.totalorder %v302, 1
        %v305 = vlaneseq
        %v306 = vshrl.u32 %v305, 7
        %v307 = vsub.s32 0, %v306
        %v308 = vrot.slane %v295, %v307
        %v310 = vsel %vm303, %v308, %v298
        %v311 = vmul.f32 %v294, %v296
        %v312 = vmul.f32 %v310, %v297
        %v313 = vadd.f32 %v311, %v312
        %vm314 = vcmask 261120
        %315 = vst.msk [vmem:[%s287] sm:$0xff] %vm314, %v313
        %s316 = sand.u32 %s152, 1
        %s317 = scalar_lea.sflag [#allocation4], %s316
        %s318 = sand.u32 %s152, 1
        %s319 = smul.addr %s318, 8
        %s320 = scalar_lea.vmem [#allocation8], %s319
        // Predicated region
        $region49: #{_rope_forward.1} parent=35 // pred_check
          %p321 = pneg %p162
        $region50: #{_rope_forward.1} parent=35 // pred_check_branch
          %323 = sbr.rel (%p321) target = $region52
        $region51: #{_rope_forward.1} parent=35 // pred_region
          %s325 = ssub.s32 128, 128
          %326 = vsyncadd %s317, %s325
          %s327 = sadd.s32 %s27, %s26
          %s328 = smul.addr %s327, 128
          %s329 = scalar_lea.hbm %s4, %s328
          %s331 = sshll.u32 %s320, 4
          %s332 = int_to_ptr.vmem [resolvable:$true] %s331
          %334 = dma.vmem_to_hbm [thread:$0]  %s332, 128, %s329, %s317
        $region52: #{_rope_forward.1} parent=35 // pred_fallthru
          _
      $region36: #{_rope_forward.1} parent=5 // pred_fallthru
        _
      %p335 = scmp.le.s32.totalorder 2, %s17
      // Predicated region
      $region53: #{_rope_forward.1} parent=5 // pred_check
        %p336 = pneg %p335
      $region54: #{_rope_forward.1} parent=5 // pred_check_branch
        %338 = sbr.rel (%p336) target = $region56
      $region55: #{_rope_forward.1} parent=5 // pred_region
        %s339 = ssub.s32 %s17, 2
        // Predicated region
        $region57: #{_rope_forward.1} parent=55 // pred_check
          %p340 = pneg %p168
        $region58: #{_rope_forward.1} parent=55 // pred_check_branch
          %342 = sbr.rel (%p340) target = $region60
        $region59: #{_rope_forward.1} parent=55 // pred_region
          %s343 = sand.u32 %s153, 1
          %s344 = scalar_lea.sflag [#allocation4], %s343
          %s345 = sand.u32 %s153, 1
          %s346 = smul.addr %s345, 8
          %s347 = scalar_lea.vmem [#allocation8], %s346
          %348 = dma.done %s344, 128
        $region60: #{_rope_forward.1} parent=55 // pred_fallthru
          _
      $region56: #{_rope_forward.1} parent=5 // pred_fallthru
        _
    $region6: #{_rope_forward.1} parent=1 // loop_footer
      %s21 = sadd.s32 1, %s17
    $region7: #{_rope_forward.1} parent=1 // loop_footer_branch
      %16 = sbr.rel target = $region3
    $region8: #{_rope_forward.1} parent=1 // loop_exit
      _
    %349 = vsyncpa [#allocation3], 1
    %s350 = scalar_lea.sflag [#allocation3], 1
    %351 = vsyncpa %s350, 1
    %352 = vsyncpa [#allocation6], 1
    %353 = vsyncpa [#allocation4], 1
    %s354 = scalar_lea.sflag [#allocation4], 1
    %355 = vsyncpa %s354, 1

</llo_original>
